<compile_context>
chip_gen: v7x
topology: tpu7x:2x2x1
jax: 0.10.0
libtpu: 0.0.40
codegen_flags: <defaults>
</compile_context>

<pallas_src>
import functools
import math

import jax
import jax.numpy as jnp
from jax.experimental import pallas as pl
from jax.experimental.pallas import tpu as pltpu

_LANE = 128
_NUM_SPLITS = 2  # leading "parallel" grid axis -> 2 TensorCores on v7x


def _vmem_capacity_bytes():
    try:
        return int(pltpu.get_tpu_info().vmem_capacity_bytes)
    except Exception:
        return 64 * 1024 * 1024  # conservative: valid on v5e/v6e/v7x


def _row_block_map(c, i, *, inner, n_tiles):
    # Clamp so over-covering tail iterations never index past the array; their
    # contribution is masked out in-kernel via the global-row check.
    blk = c * inner + i
    return (jnp.minimum(blk, n_tiles - 1), 0)


def _loss_ls_kernel(pred_ref, tgt_ref, loss_ref, cnt_ref, *,
                    smooth_val, confidence, h_const, row_tile, n_rows):
    c = pl.program_id(0)
    i = pl.program_id(1)
    n_inner = pl.num_programs(1)

    # Output blocks are indexed only by the parallel axis c -> they stay
    # resident across the inner (reduction) axis and act as accumulators.
    @pl.when(i == 0)
    def _():
        loss_ref[...] = jnp.zeros_like(loss_ref)
        cnt_ref[...] = jnp.zeros_like(cnt_ref)

    pred = pred_ref[...].astype(jnp.float32)        # (row_tile, V), upcast in-kernel
    tgt = tgt_ref[...]                              # (row_tile, 1) int32

    tn, v = pred.shape
    # (1, V) lane iota broadcast inside the compare (cheaper than a full
    # (row_tile, V) iota regenerated every step).
    lane = jax.lax.broadcasted_iota(jnp.int32, (1, v), 1)
    onehot = lane == tgt                            # (row_tile, V)

    # log(labels) is folded into the compile-time constant h_const; per-row
    # loss is  h_const - sum_v w[v] * pred[v]  with w in {smooth/(size-1), conf}.
    w = jnp.where(onehot, jnp.float32(confidence), jnp.float32(smooth_val))
    row_dot = jnp.sum(w * pred, axis=1, keepdims=True)   # (row_tile, 1)
    row_loss = jnp.float32(h_const) - row_dot

    # Valid rows: inside the real row range (tail / over-covered blocks may
    # contain garbage -> NaN-safe select, not multiply) and non-padding target.
    blk = c * n_inner + i
    row_idx = blk * row_tile + jax.lax.broadcasted_iota(jnp.int32, (tn, 1), 0)
    valid = jnp.logical_and(row_idx < n_rows, tgt > 0)    # (row_tile, 1) bool

    loss_ref[...] += jnp.where(valid, row_loss, 0.0)
    cnt_ref[...] += valid.astype(jnp.float32)


def loss_with_ls(prediction, target, *, size, smooth, row_tile=None):
    """prediction: (B, T, V) float log-probs (any float dtype); target: (B, T) int."""
    b, t, v = prediction.shape
    assert v == size
    n = b * t

    smooth = float(smooth)
    confidence = 1.0 - smooth
    smooth_val = smooth / (size - 1) if size > 1 else 0.0
    # H = sum_v labels*log(labels); xlogy convention (0*log0 == 0) like PyTorch.
    h_const = 0.0
    if smooth_val > 0.0:
        h_const += (size - 1) * smooth_val * math.log(smooth_val)
    if confidence > 0.0:
        h_const += confidence * math.log(confidence)

    dbytes = jnp.dtype(prediction.dtype).itemsize
    pack = 8 * max(1, 4 // dbytes)            # sublane packing: f32->8, bf16->16, 8-bit->32
    v_lane = -(-v // _LANE) * _LANE           # lane padding of the VMEM tile

    vmem_cap = _vmem_capacity_bytes()
    if row_tile is None:
        budget = int(0.4 * vmem_cap)          # budget for the double-buffered pred block
        max_rows = max(pack, (budget // (2 * v_lane * dbytes)) // pack * pack)
        rows_per_split = -(-n // _NUM_SPLITS)
        rows_per_split = -(-rows_per_split // pack) * pack
        row_tile = int(min(max_rows, 2048, max(rows_per_split, pack)))
    row_tile = max(pack, -(-int(row_tile) // pack) * pack)

    n_tiles = -(-n // row_tile)
    num_splits = _NUM_SPLITS if n_tiles >= _NUM_SPLITS else 1
    inner = -(-n_tiles // num_splits)

    pred2 = prediction.reshape(n, v)                      # native dtype, no copy pass
    tgt2 = target.reshape(n, 1).astype(jnp.int32)

    kernel = functools.partial(
        _loss_ls_kernel, smooth_val=smooth_val, confidence=confidence,
        h_const=h_const, row_tile=row_tile, n_rows=n)
    row_map = functools.partial(_row_block_map, inner=inner, n_tiles=n_tiles)

    # VMEM: double-buffered pred + tgt blocks + resident output accumulators
    # (all lane/sublane-padded) + headroom.
    needed = (2 * row_tile * v_lane * dbytes              # pred double-buffer
              + 2 * row_tile * _LANE * 4                  # tgt (lane-padded int32)
              + 2 * 2 * row_tile * _LANE * 4              # loss/cnt accumulators
              + (4 << 20))
    vmem_limit = int(min(max(needed, 32 << 20), int(0.9 * vmem_cap)))

    loss_rows, cnt_rows = pl.pallas_call(
        kernel,
        out_shape=(
            jax.ShapeDtypeStruct((num_splits * row_tile, 1), jnp.float32),
            jax.ShapeDtypeStruct((num_splits * row_tile, 1), jnp.float32),
        ),
        grid_spec=pltpu.PrefetchScalarGridSpec(
            num_scalar_prefetch=0,
            grid=(num_splits, inner),
            in_specs=[
                pl.BlockSpec((row_tile, v), row_map),     # full-V block: %128 exempt
                pl.BlockSpec((row_tile, 1), row_map),
            ],
            out_specs=(
                pl.BlockSpec((row_tile, 1), lambda c, i: (c, 0)),
                pl.BlockSpec((row_tile, 1), lambda c, i: (c, 0)),
            ),
        ),
        compiler_params=pltpu.CompilerParams(
            dimension_semantics=("parallel", "arbitrary"),
            vmem_limit_bytes=vmem_limit),
    )(pred2, tgt2)

    # Tiny final reduce + division in the wrapper.
    return jnp.sum(loss_rows) / jnp.sum(cnt_rows)


def _reference(prediction, target, *, size, smooth):
    b, t, v = prediction.shape
    pred = prediction.reshape(-1, v).astype(jnp.float32)
    tgt = target.reshape(-1)
    mask = (tgt > 0).astype(jnp.float32)
    labels = jnp.full_like(pred, smooth / (size - 1))
    labels = labels.at[jnp.arange(pred.shape[0]), tgt].set(1.0 - smooth)
    kl = labels * (jnp.log(labels) - pred)
    return (kl.sum(1) * mask).sum() / mask.sum()


if __name__ == "__main__":
    key = jax.random.PRNGKey(0)
    k1, k2, k3, k4 = jax.random.split(key, 4)
    SMOOTH = 0.1

    # Test 1: module-consistent small shapes, f32 log-probs.
    B, T, V = 2, 8, 32
    logits = jax.random.normal(k1, (B, T, V), dtype=jnp.float32)
    prediction = jax.nn.log_softmax(logits, axis=-1)
    target = jax.random.randint(k2, (B, T), 0, V, dtype=jnp.int32)
    loss = jax.block_until_ready(
        loss_with_ls(prediction, target, size=V, smooth=SMOOTH))
    ref = _reference(prediction, target, size=V, smooth=SMOOTH)
    assert jnp.allclose(loss, ref, rtol=1e-4, atol=1e-5), (loss, ref)

    # Test 2: odd shapes -> partial tail block + over-covered split (clamped
    # block index), non-128 vocab, explicit small row tile.
    B2, T2, V2 = 3, 7, 50
    logits2 = jax.random.normal(k3, (B2, T2, V2), dtype=jnp.float32)
    prediction2 = jax.nn.log_softmax(logits2, axis=-1)
    target2 = jax.random.randint(k4, (B2, T2), 0, V2, dtype=jnp.int32)
    loss2 = jax.block_until_ready(
        loss_with_ls(prediction2, target2, size=V2, smooth=SMOOTH, row_tile=8))
    ref2 = _reference(prediction2, target2, size=V2, smooth=SMOOTH)
    assert jnp.allclose(loss2, ref2, rtol=1e-4, atol=1e-5), (loss2, ref2)

    # Test 3: bf16 prediction streamed natively from HBM, upcast in-kernel.
    pred_bf16 = prediction.astype(jnp.bfloat16)
    loss3 = jax.block_until_ready(
        loss_with_ls(pred_bf16, target, size=V, smooth=SMOOTH))
    ref3 = _reference(pred_bf16, target, size=V, smooth=SMOOTH)
    assert jnp.allclose(loss3, ref3, rtol=5e-3, atol=5e-3), (loss3, ref3)

    print("KERNEL_OK")
</pallas_src>

<mosaic_0001>
module attributes {stable_mosaic.version = 11 : i64} {
  func.func @_loss_ls_kernel(%arg0: i32, %arg1: i32, %arg2: memref<8x32xf32, #tpu.memory_space<vmem>>, %arg3: memref<8x1xi32, #tpu.memory_space<vmem>>, %arg4: memref<8x1xf32, #tpu.memory_space<vmem>>, %arg5: memref<8x1xf32, #tpu.memory_space<vmem>>) attributes {dimension_semantics = [#tpu.dimension_semantics<parallel>, #tpu.dimension_semantics<arbitrary>], iteration_bounds = array<i64: 2, 1>, scalar_prefetch = 0 : i64, scratch_operands = 0 : i64, tpu.core_type = #tpu.core_type<tc>, window_params = [{transform_indices = @transform_0, window_bounds = array<i64: 8, 32>}, {transform_indices = @transform_1, window_bounds = array<i64: 8, 1>}, {transform_indices = @transform_2, window_bounds = array<i64: 8, 1>}, {transform_indices = @transform_3, window_bounds = array<i64: 8, 1>}]} {
    %c0_i32 = arith.constant 0 : i32
    %0 = arith.cmpi eq, %arg1, %c0_i32 : i32
    %1 = arith.extui %0 : i1 to i32
    %c0_i32_0 = arith.constant 0 : i32
    %2 = arith.cmpi ne, %1, %c0_i32_0 : i32
    scf.if %2 {
      %cst_17 = arith.constant 0.000000e+00 : f32
      %38 = vector.broadcast %cst_17 : f32 to vector<8x1xf32>
      %c0_18 = arith.constant 0 : index
      %c0_19 = arith.constant 0 : index
      %39 = vector.load %arg4[%c0_18, %c0_19] : memref<8x1xf32, #tpu.memory_space<vmem>>, vector<8x1xf32>
      tpu.vector_store %arg4[%c0_18, %c0_19], %38 {strides = array<i32>} : memref<8x1xf32, #tpu.memory_space<vmem>>, vector<8x1xf32>,
      %cst_20 = arith.constant 0.000000e+00 : f32
      %40 = vector.broadcast %cst_20 : f32 to vector<8x1xf32>
      %c0_21 = arith.constant 0 : index
      %c0_22 = arith.constant 0 : index
      %41 = vector.load %arg5[%c0_21, %c0_22] : memref<8x1xf32, #tpu.memory_space<vmem>>, vector<8x1xf32>
      tpu.vector_store %arg5[%c0_21, %c0_22], %40 {strides = array<i32>} : memref<8x1xf32, #tpu.memory_space<vmem>>, vector<8x1xf32>,
    } else {
    }
    %c0 = arith.constant 0 : index
    %c0_1 = arith.constant 0 : index
    %3 = vector.load %arg2[%c0, %c0_1] : memref<8x32xf32, #tpu.memory_space<vmem>>, vector<8x32xf32>
    %c0_2 = arith.constant 0 : index
    %c0_3 = arith.constant 0 : index
    %4 = vector.load %arg3[%c0_2, %c0_3] : memref<8x1xi32, #tpu.memory_space<vmem>>, vector<8x1xi32>
    %5 = tpu.iota {dimensions = array<i32: 1>} : vector<1x32xi32>
    %6 = vector.broadcast %5 : vector<1x32xi32> to vector<8x32xi32>
    %7 = vector.broadcast %4 : vector<8x1xi32> to vector<8x32xi32>
    %8 = arith.cmpi eq, %6, %7 : vector<8x32xi32>
    %cst = arith.constant 0.899999976 : f32
    %cst_4 = arith.constant 0.0032258064 : f32
    %9 = vector.broadcast %cst : f32 to vector<8x32xf32>
    %10 = vector.broadcast %cst_4 : f32 to vector<8x32xf32>
    %11 = arith.select %8, %9, %10 : vector<8x32xi1>, vector<8x32xf32>
    %12 = arith.mulf %11, %3 : vector<8x32xf32>
    %cst_5 = arith.constant dense<0.000000e+00> : vector<8xf32>
    %13 = vector.multi_reduction <add>, %12, %cst_5 [1] : vector<8x32xf32> to vector<8xf32>
    %14 = vector.shape_cast %13 : vector<8xf32> to vector<8x1xf32>
    %cst_6 = arith.constant -0.668481708 : f32
    %15 = vector.broadcast %cst_6 : f32 to vector<8x1xf32>
    %16 = arith.subf %15, %14 : vector<8x1xf32>
    %c1_i32 = arith.constant 1 : i32
    %17 = arith.muli %arg0, %c1_i32 : i32
    %18 = arith.addi %17, %arg1 : i32
    %c8_i32 = arith.constant 8 : i32
    %19 = arith.muli %18, %c8_i32 : i32
    %20 = tpu.iota {dimensions = array<i32: 0>} : vector<8x1xi32>
    %21 = vector.broadcast %19 : i32 to vector<8x1xi32>
    %22 = arith.addi %21, %20 : vector<8x1xi32>
    %c16_i32 = arith.constant 16 : i32
    %23 = vector.broadcast %c16_i32 : i32 to vector<8x1xi32>
    %24 = arith.cmpi slt, %22, %23 : vector<8x1xi32>
    %c0_i32_7 = arith.constant 0 : i32
    %25 = vector.broadcast %c0_i32_7 : i32 to vector<8x1xi32>
    %26 = arith.cmpi sgt, %4, %25 : vector<8x1xi32>
    %27 = arith.andi %24, %26 : vector<8x1xi1>
    %c0_8 = arith.constant 0 : index
    %c0_9 = arith.constant 0 : index
    %28 = vector.load %arg4[%c0_8, %c0_9] : memref<8x1xf32, #tpu.memory_space<vmem>>, vector<8x1xf32>
    %cst_10 = arith.constant 0.000000e+00 : f32
    %29 = vector.broadcast %cst_10 : f32 to vector<8x1xf32>
    %30 = arith.select %27, %16, %29 : vector<8x1xi1>, vector<8x1xf32>
    %31 = arith.addf %28, %30 : vector<8x1xf32>
    %c0_11 = arith.constant 0 : index
    %c0_12 = arith.constant 0 : index
    %32 = vector.load %arg4[%c0_11, %c0_12] : memref<8x1xf32, #tpu.memory_space<vmem>>, vector<8x1xf32>
    tpu.vector_store %arg4[%c0_11, %c0_12], %31 {strides = array<i32>} : memref<8x1xf32, #tpu.memory_space<vmem>>, vector<8x1xf32>,
    %c0_13 = arith.constant 0 : index
    %c0_14 = arith.constant 0 : index
    %33 = vector.load %arg5[%c0_13, %c0_14] : memref<8x1xf32, #tpu.memory_space<vmem>>, vector<8x1xf32>
    %34 = arith.extui %27 : vector<8x1xi1> to vector<8x1xi32>
    %35 = arith.sitofp %34 : vector<8x1xi32> to vector<8x1xf32>
    %36 = arith.addf %33, %35 : vector<8x1xf32>
    %c0_15 = arith.constant 0 : index
    %c0_16 = arith.constant 0 : index
    %37 = vector.load %arg5[%c0_15, %c0_16] : memref<8x1xf32, #tpu.memory_space<vmem>>, vector<8x1xf32>
    tpu.vector_store %arg5[%c0_15, %c0_16], %36 {strides = array<i32>} : memref<8x1xf32, #tpu.memory_space<vmem>>, vector<8x1xf32>,
    return
  }
  func.func @transform_0(%arg0: i32, %arg1: i32) -> (i32, i32) {
    %c1_i32 = arith.constant 1 : i32
    %0 = arith.muli %arg0, %c1_i32 : i32
    %1 = arith.addi %0, %arg1 : i32
    %c1_i32_0 = arith.constant 1 : i32
    %2 = arith.minsi %1, %c1_i32_0 : i32
    %c0_i32 = arith.constant 0 : i32
    %c0_i32_1 = arith.constant 0 : i32
    return %2, %c0_i32 : i32, i32
  }
  func.func @transform_1(%arg0: i32, %arg1: i32) -> (i32, i32) {
    %c1_i32 = arith.constant 1 : i32
    %0 = arith.muli %arg0, %c1_i32 : i32
    %1 = arith.addi %0, %arg1 : i32
    %c1_i32_0 = arith.constant 1 : i32
    %2 = arith.minsi %1, %c1_i32_0 : i32
    %c0_i32 = arith.constant 0 : i32
    %c0_i32_1 = arith.constant 0 : i32
    return %2, %c0_i32 : i32, i32
  }
  func.func @transform_2(%arg0: i32, %arg1: i32) -> (i32, i32) {
    %c0_i32 = arith.constant 0 : i32
    %c0_i32_0 = arith.constant 0 : i32
    return %arg0, %c0_i32 : i32, i32
  }
  func.func @transform_3(%arg0: i32, %arg1: i32) -> (i32, i32) {
    %c0_i32 = arith.constant 0 : i32
    %c0_i32_0 = arith.constant 0 : i32
    return %arg0, %c0_i32 : i32, i32
  }
}

</mosaic_0001>

<llo_original>
// kernel: tpu_custom_call.1
$region0: #{tpu_custom_call.1}
  #allocation0 [shape = 'u32[]', space=smem, size = 0x4, offset = 0x4, fixed_abs, tag = 'smem constant byte address 0x4 - core index']
  #allocation1 [shape = 'u32[144,128]{1,0:T(1,128)}', space=vmem, size = 0x12000, scoped, tag = 'internal scratch']
  %s0 = inlined_call_operand.vmem [shape: f32[16,32], index: 0, kind: input, shape index: {}]
  %s1 = inlined_call_operand.vmem [shape: s32[16,1], index: 1, kind: input, shape index: {}]
  %s2 = inlined_call_operand.vmem [shape: f32[16,1], index: 2, kind: output, shape index: {0}]
  %s3 = inlined_call_operand.vmem [shape: f32[16,1], index: 3, kind: output, shape index: {1}]
  %4 = xla_tuple %s2, %s3
  %s5 = sld [smem:[#allocation0]]
  $region53: #{tpu_custom_call.1} parent=0
    _
  %s7 = ssub.s32 1, %s5
  %s8 = scalar_select 0, %s7, %s5
  loop: start=0, step=1, limit=4
  $region2: #{tpu_custom_call.1} parent=0 // loop_pre_header
    _
  $region3: #{tpu_custom_call.1} parent=0 // loop_header
    %s10 = sphi 0, %s14
    %p11 = scmp.ge.s32.totalorder %s10, 4
    %s17 = sphi 0, %s29
    %s18 = sphi 0, %s25
    %s19 = sphi 0, %s17
    %s20 = sphi 0, %s18
    %s21 = sphi 0, %s19
    %s22 = sphi 0, %s20
    %s38 = sphi 0, %s40
    %s41 = sphi 0, %s38
    %s42 = sphi 0, %s41
    %s58 = sphi 0, %s42
    %s70 = sphi 0, %s72
    %s73 = sphi 0, %s70
    %s74 = sphi 0, %s73
    %s90 = sphi 0, %s74
    %s96 = sphi 0, %s98
    %s99 = sphi 0, %s96
    %s100 = sphi 0, %s99
    %s116 = sphi 0, %s100
    %s122 = sphi 0, %s124
    %s125 = sphi 0, %s122
    %s126 = sphi 0, %s125
    %s142 = sphi 0, %s126
  $region4: #{tpu_custom_call.1} parent=0 // loop_header_branch
    %13 = sbr.rel (%p11) target = $region8
  $region5: #{tpu_custom_call.1} parent=0 // loop_body
    %s15 = ssub.s32 %s10, 1
    %s16 = ssub.s32 %s10, 2
    %s23 = sadd.s32 1, %s18
    %p24 = scmp.ge.s32.totalorder %s23, 1
    %s25 = scalar_select %p24, 0, %s23
    %s26 = sadd.s32 1, %s17
    %s27 = scalar_select %p24, %s26, %s17
    %p28 = scmp.ge.s32.totalorder %s27, 2
    %s29 = scalar_select %p28, 0, %s27
    %s30 = sadd.s32 %s17, %s18
    %p31 = scmp.lt.s32.totalorder %s30, 1
    %s32 = scalar_select %p31, %s30, 1
    %s33 = sadd.s32 %s29, %s25
    %p34 = scmp.lt.s32.totalorder %s33, 1
    %s35 = scalar_select %p34, %s33, 1
    %s36 = ssub.s32 %s32, %s35
    %p37 = scmp.eq.s32.totalorder %s36, 0
    %s39 = sadd.s32 %s38, 1
    %s40 = scalar_select %p37, %s38, %s39
    %p43 = pneg %p37
    %p44 = scmp.eq.s32.totalorder %s10, 1
    %p45 = por %p43, %p44
    %p46 = scmp.ne.s32.totalorder %s38, %s41
    %p47 = scmp.eq.s32.totalorder %s10, 0
    %p48 = por %p46, %p47
    %p49 = scmp.ne.s32.totalorder %s38, %s41
    %p50 = scmp.eq.s32.totalorder %s15, 1
    %p51 = por %p49, %p50
    %p52 = scmp.ne.s32.totalorder %s41, %s42
    %p53 = scmp.eq.s32.totalorder %s15, 0
    %p54 = por %p52, %p53
    %p55 = scmp.ne.s32.totalorder %s41, %s42
    %p56 = scmp.eq.s32.totalorder %s16, 1
    %p57 = por %p55, %p56
    %p59 = scmp.ne.s32.totalorder %s42, %s58
    %p60 = scmp.eq.s32.totalorder %s16, 0
    %p61 = por %p59, %p60
    %s62 = sadd.s32 %s17, %s18
    %p63 = scmp.lt.s32.totalorder %s62, 1
    %s64 = scalar_select %p63, %s62, 1
    %s65 = sadd.s32 %s29, %s25
    %p66 = scmp.lt.s32.totalorder %s65, 1
    %s67 = scalar_select %p66, %s65, 1
    %s68 = ssub.s32 %s64, %s67
    %p69 = scmp.eq.s32.totalorder %s68, 0
    %s71 = sadd.s32 %s70, 1
    %s72 = scalar_select %p69, %s70, %s71
    %p75 = pneg %p69
    %p76 = scmp.eq.s32.totalorder %s10, 1
    %p77 = por %p75, %p76
    %p78 = scmp.ne.s32.totalorder %s70, %s73
    %p79 = scmp.eq.s32.totalorder %s10, 0
    %p80 = por %p78, %p79
    %p81 = scmp.ne.s32.totalorder %s70, %s73
    %p82 = scmp.eq.s32.totalorder %s15, 1
    %p83 = por %p81, %p82
    %p84 = scmp.ne.s32.totalorder %s73, %s74
    %p85 = scmp.eq.s32.totalorder %s15, 0
    %p86 = por %p84, %p85
    %p87 = scmp.ne.s32.totalorder %s73, %s74
    %p88 = scmp.eq.s32.totalorder %s16, 1
    %p89 = por %p87, %p88
    %p91 = scmp.ne.s32.totalorder %s74, %s90
    %p92 = scmp.eq.s32.totalorder %s16, 0
    %p93 = por %p91, %p92
    %s94 = ssub.s32 %s17, %s29
    %p95 = scmp.eq.s32.totalorder %s94, 0
    %s97 = sadd.s32 %s96, 1
    %s98 = scalar_select %p95, %s96, %s97
    %p101 = pneg %p95
    %p102 = scmp.eq.s32.totalorder %s10, 1
    %p103 = por %p101, %p102
    %p104 = scmp.ne.s32.totalorder %s96, %s99
    %p105 = scmp.eq.s32.totalorder %s10, 0
    %p106 = por %p104, %p105
    %p107 = scmp.ne.s32.totalorder %s96, %s99
    %p108 = scmp.eq.s32.totalorder %s15, 1
    %p109 = por %p107, %p108
    %p110 = scmp.ne.s32.totalorder %s99, %s100
    %p111 = scmp.eq.s32.totalorder %s15, 0
    %p112 = por %p110, %p111
    %p113 = scmp.ne.s32.totalorder %s99, %s100
    %p114 = scmp.eq.s32.totalorder %s16, 1
    %p115 = por %p113, %p114
    %p117 = scmp.ne.s32.totalorder %s100, %s116
    %p118 = scmp.eq.s32.totalorder %s16, 0
    %p119 = por %p117, %p118
    %s120 = ssub.s32 %s17, %s29
    %p121 = scmp.eq.s32.totalorder %s120, 0
    %s123 = sadd.s32 %s122, 1
    %s124 = scalar_select %p121, %s122, %s123
    %p127 = pneg %p121
    %p128 = scmp.eq.s32.totalorder %s10, 1
    %p129 = por %p127, %p128
    %p130 = scmp.ne.s32.totalorder %s122, %s125
    %p131 = scmp.eq.s32.totalorder %s10, 0
    %p132 = por %p130, %p131
    %p133 = scmp.ne.s32.totalorder %s122, %s125
    %p134 = scmp.eq.s32.totalorder %s15, 1
    %p135 = por %p133, %p134
    %p136 = scmp.ne.s32.totalorder %s125, %s126
    %p137 = scmp.eq.s32.totalorder %s15, 0
    %p138 = por %p136, %p137
    %p139 = scmp.ne.s32.totalorder %s125, %s126
    %p140 = scmp.eq.s32.totalorder %s16, 1
    %p141 = por %p139, %p140
    %p143 = scmp.ne.s32.totalorder %s126, %s142
    %p144 = scmp.eq.s32.totalorder %s16, 0
    %p145 = por %p143, %p144
    %p146 = scmp.le.s32.totalorder 1, %s10
    %p147 = scmp.lt.s32.totalorder %s10, 3
    %p148 = pnand %p146, %p147
    %p149 = pneg %p148
    // Predicated region
    $region9: #{tpu_custom_call.1} parent=5 // pred_check
      _
    $region10: #{tpu_custom_call.1} parent=5 // pred_check_branch
      %151 = sbr.rel (%p148) target = $region12
    $region11: #{tpu_custom_call.1} parent=5 // pred_region
      %s152 = ssub.s32 %s10, 1
    $region12: #{tpu_custom_call.1} parent=5 // pred_fallthru
      _
    %p153 = scmp.lt.s32.totalorder %s10, 2
    // Predicated region
    $region13: #{tpu_custom_call.1} parent=5 // pred_check
      %p154 = pneg %p153
    $region14: #{tpu_custom_call.1} parent=5 // pred_check_branch
      %156 = sbr.rel (%p154) target = $region16
    $region15: #{tpu_custom_call.1} parent=5 // pred_region
      // Predicated region
      $region17: #{tpu_custom_call.1} parent=15 // pred_check
        %p157 = pneg %p48
      $region18: #{tpu_custom_call.1} parent=15 // pred_check_branch
        %159 = sbr.rel (%p157) target = $region20
      $region19: #{tpu_custom_call.1} parent=15 // pred_region
        %s160 = sadd.s32 %s17, %s18
        %p161 = scmp.lt.s32.totalorder %s160, 1
        %s162 = scalar_select %p161, %s160, 1
        %p163 = scmp.lt.s32.totalorder %s162, 1
        %s164 = scalar_select %p163, %s162, 1
        %s165 = smul.addr %s164, 8
        %s166 = scalar_lea.vmem %s0, %s165
        %s167 = sadd.s32 %s17, %s18
        %p168 = scmp.lt.s32.totalorder %s167, 1
        %s169 = scalar_select %p168, %s167, 1
      $region20: #{tpu_custom_call.1} parent=15 // pred_fallthru
        _
      // Predicated region
      $region21: #{tpu_custom_call.1} parent=15 // pred_check
        %p170 = pneg %p80
      $region22: #{tpu_custom_call.1} parent=15 // pred_check_branch
        %172 = sbr.rel (%p170) target = $region24
      $region23: #{tpu_custom_call.1} parent=15 // pred_region
        %s173 = sadd.s32 %s17, %s18
        %p174 = scmp.lt.s32.totalorder %s173, 1
        %s175 = scalar_select %p174, %s173, 1
        %p176 = scmp.lt.s32.totalorder %s175, 1
        %s177 = scalar_select %p176, %s175, 1
        %s178 = smul.addr %s177, 8
        %s179 = scalar_lea.vmem %s1, %s178
        %s180 = sadd.s32 %s17, %s18
        %p181 = scmp.lt.s32.totalorder %s180, 1
        %s182 = scalar_select %p181, %s180, 1
      $region24: #{tpu_custom_call.1} parent=15 // pred_fallthru
        _
    $region16: #{tpu_custom_call.1} parent=5 // pred_fallthru
      _
    %p183 = scmp.le.s32.totalorder 1, %s10
    %p184 = scmp.lt.s32.totalorder %s10, 3
    %p185 = pnand %p183, %p184
    %p186 = pneg %p185
    // Predicated region
    $region25: #{tpu_custom_call.1} parent=5 // pred_check
      _
    $region26: #{tpu_custom_call.1} parent=5 // pred_check_branch
      %188 = sbr.rel (%p185) target = $region28
    $region27: #{tpu_custom_call.1} parent=5 // pred_region
      %s189 = ssub.s32 %s10, 1
      %s190 = sadd.s32 %s19, %s20
      %p191 = scmp.lt.s32.totalorder %s190, 1
      %s192 = scalar_select %p191, %s190, 1
      %p193 = scmp.lt.s32.totalorder %s192, 1
      %s194 = scalar_select %p193, %s192, 1
      %s195 = smul.addr %s194, 8
      %s196 = scalar_lea.vmem %s0, %s195
      %p197 = pneg %p54
      %p198 = pneg %p51
      %s199 = sadd.s32 %s19, %s20
      %p200 = scmp.lt.s32.totalorder %s199, 1
      %s201 = scalar_select %p200, %s199, 1
      %p202 = scmp.lt.s32.totalorder %s201, 1
      %s203 = scalar_select %p202, %s201, 1
      %s204 = smul.addr %s203, 8
      %s205 = scalar_lea.vmem %s1, %s204
      %p206 = pneg %p86
      %p207 = pneg %p83
      %p208 = pneg %p112
      %p209 = pneg %p109
      %p210 = scmp.lt.s32.totalorder %s19, 1
      %s211 = scalar_select %p210, %s19, 1
      %s212 = smul.addr %s211, 8
      %s213 = scalar_lea.vmem %s2, %s212
      %p214 = pneg %p138
      %p215 = pneg %p135
      %p216 = scmp.lt.s32.totalorder %s19, 1
      %s217 = scalar_select %p216, %s19, 1
      %s218 = smul.addr %s217, 8
      %s219 = scalar_lea.vmem %s3, %s218
      %s220 = sadd.s32 %s19, %s20
      %p221 = scmp.lt.s32.totalorder %s220, 1
      %s222 = scalar_select %p221, %s220, 1
      %p223 = scmp.lt.s32.totalorder %s222, 1
      %s224 = scalar_select %p223, %s222, 1
      %s225 = smul.addr %s224, 8
      %s226 = scalar_lea.vmem %s0, %s225
      %s227 = sadd.s32 %s19, %s20
      %p228 = scmp.lt.s32.totalorder %s227, 1
      %s229 = scalar_select %p228, %s227, 1
      %s230 = sadd.s32 %s19, %s20
      %p231 = scmp.lt.s32.totalorder %s230, 1
      %s232 = scalar_select %p231, %s230, 1
      %p233 = scmp.lt.s32.totalorder %s232, 1
      %s234 = scalar_select %p233, %s232, 1
      %s235 = smul.addr %s234, 8
      %s236 = scalar_lea.vmem %s1, %s235
      %s237 = sadd.s32 %s19, %s20
      %p238 = scmp.lt.s32.totalorder %s237, 1
      %s239 = scalar_select %p238, %s237, 1
      %p240 = scmp.lt.s32.totalorder %s19, 1
      %s241 = scalar_select %p240, %s19, 1
      %s242 = smul.addr %s241, 8
      %s243 = scalar_lea.vmem %s2, %s242
      %p244 = scmp.lt.s32.totalorder %s19, 1
      %s245 = scalar_select %p244, %s19, 1
      %s246 = smul.addr %s245, 8
      %s247 = scalar_lea.vmem %s3, %s246
      %p248 = scmp.eq.s32.totalorder %s20, 0
      // Predicated region
      $region29: #{tpu_custom_call.1} parent=27 // pred_check
        %p249 = pneg %p248
      $region30: #{tpu_custom_call.1} parent=27 // pred_check_branch
        %251 = sbr.rel (%p249) target = $region32
      $region31: #{tpu_custom_call.1} parent=27 // pred_region
        %vm252 = vcmask 7168
        %253 = vst.msk [vmem:[%s243] sm:$0xff] %vm252, 0.0
        %254 = vst.msk [vmem:[%s247] sm:$0xff] %vm252, 0.0
      $region32: #{tpu_custom_call.1} parent=27 // pred_fallthru
        _
      %v255 = vld [vmem:[%s226] sm:$0xff]
      %v256 = vld [vmem:[%s236] sm:$0xff]
      %v257 = vlaneseq
      %v258 = vand.u32 %v257, 127
      %259 = vset.pattern.permute.xlu0 0
      %260 = vperm.xlu0 %259, %v256
      %v261 = vpop.permute.xlu0 %260
      %vm262 = vcmp.eq.s32.totalorder %v258, %v261
      %v263 = vsel %vm262, 0.9, 0.0032258064
      %v264 = vmul.f32 %v263, %v255
      %vm265 = vcmask 261120
      %v266 = vsel %vm265, %v264, 0.0
      %267 = vadd.xlane.f32.xlu0 %v266
      %v268 = vpop.xlane.xlu0 %267
      %v269 = vsub.f32 -0.6684817, %v268
      %s270 = sadd.s32 %s19, %s20
      %s271 = smul.u32 %s270, 8
      %v272 = vlaneseq
      %v273 = vshrl.u32 %v272, 7
      %v274 = vstv %s271
      %v275 = vadd.s32 %v274, %v273
      %vm276 = vcmp.lt.s32.totalorder %v275, 16
      %vm277 = vcmp.gt.s32.totalorder %v256, 0
      %vm278 = vmand %vm276, %vm277
      %v279 = vld [vmem:[%s243] sm:$0xff]
      %v280 = vsel %vm278, %v269, 0.0
      %v281 = vadd.f32 %v279, %v280
      %vm282 = vcmask 7168
      %283 = vst.msk [vmem:[%s243] sm:$0xff] %vm282, %v281
      %v284 = vld [vmem:[%s247] sm:$0xff]
      %v285 = vsel %vm278, 1, 0
      %v286 = vcvt.s32.f32 %v285
      %v287 = vadd.f32 %v284, %v286
      %288 = vst.msk [vmem:[%s247] sm:$0xff] %vm282, %v287
      %p289 = scmp.lt.s32.totalorder %s19, 1
      %s290 = scalar_select %p289, %s19, 1
      %s291 = smul.addr %s290, 8
      %s292 = scalar_lea.vmem %s2, %s291
      %p293 = scmp.lt.s32.totalorder %s19, 1
      %s294 = scalar_select %p293, %s19, 1
      %s295 = smul.addr %s294, 8
      %s296 = scalar_lea.vmem %s3, %s295
      // Predicated region
      $region33: #{tpu_custom_call.1} parent=27 // pred_check
        %p297 = pneg %p109
      $region34: #{tpu_custom_call.1} parent=27 // pred_check_branch
        %299 = sbr.rel (%p297) target = $region36
      $region35: #{tpu_custom_call.1} parent=27 // pred_region
        _
      $region36: #{tpu_custom_call.1} parent=27 // pred_fallthru
        _
      // Predicated region
      $region37: #{tpu_custom_call.1} parent=27 // pred_check
        %p300 = pneg %p135
      $region38: #{tpu_custom_call.1} parent=27 // pred_check_branch
        %302 = sbr.rel (%p300) target = $region40
      $region39: #{tpu_custom_call.1} parent=27 // pred_region
        _
      $region40: #{tpu_custom_call.1} parent=27 // pred_fallthru
        _
    $region28: #{tpu_custom_call.1} parent=5 // pred_fallthru
      _
    %p303 = scmp.le.s32.totalorder 2, %s10
    // Predicated region
    $region41: #{tpu_custom_call.1} parent=5 // pred_check
      %p304 = pneg %p303
    $region42: #{tpu_custom_call.1} parent=5 // pred_check_branch
      %306 = sbr.rel (%p304) target = $region44
    $region43: #{tpu_custom_call.1} parent=5 // pred_region
      %s307 = ssub.s32 %s10, 2
      // Predicated region
      $region45: #{tpu_custom_call.1} parent=43 // pred_check
        %p308 = pneg %p115
      $region46: #{tpu_custom_call.1} parent=43 // pred_check_branch
        %310 = sbr.rel (%p308) target = $region48
      $region47: #{tpu_custom_call.1} parent=43 // pred_region
        %p311 = scmp.lt.s32.totalorder %s21, 1
        %s312 = scalar_select %p311, %s21, 1
        %s313 = smul.addr %s312, 8
        %s314 = scalar_lea.vmem %s2, %s313
      $region48: #{tpu_custom_call.1} parent=43 // pred_fallthru
        _
      // Predicated region
      $region49: #{tpu_custom_call.1} parent=43 // pred_check
        %p315 = pneg %p141
      $region50: #{tpu_custom_call.1} parent=43 // pred_check_branch
        %317 = sbr.rel (%p315) target = $region52
      $region51: #{tpu_custom_call.1} parent=43 // pred_region
        %p318 = scmp.lt.s32.totalorder %s21, 1
        %s319 = scalar_select %p318, %s21, 1
        %s320 = smul.addr %s319, 8
        %s321 = scalar_lea.vmem %s3, %s320
      $region52: #{tpu_custom_call.1} parent=43 // pred_fallthru
        _
    $region44: #{tpu_custom_call.1} parent=5 // pred_fallthru
      _
  $region6: #{tpu_custom_call.1} parent=0 // loop_footer
    %s14 = sadd.s32 1, %s10
  $region7: #{tpu_custom_call.1} parent=0 // loop_footer_branch
    %9 = sbr.rel target = $region3
  $region8: #{tpu_custom_call.1} parent=0 // loop_exit
    _

</llo_original>
